<compile_context>
chip_gen: v7x
topology: tpu7x:2x2x1
jax: 0.10.0
libtpu: 0.0.40
codegen_flags: <defaults>
</compile_context>

<pallas_src>
import numpy as np
import jax
import jax.numpy as jnp
from jax.experimental import pallas as pl
from jax.experimental.pallas import tpu as pltpu


# ----------------------------------------------------------------------------
# Lanczos log-gamma (g=7, 9 coefficients), rewritten as a rational polynomial
# P(z)/Q(z) so each evaluation costs one divide instead of eight.
# Valid for the positive arguments used here (k+1 >= 1, k+r > 0).
# ----------------------------------------------------------------------------
_LANCZOS_G = 7.0
_LANCZOS_COEFS = (
    0.99999999999980993,
    676.5203681218851,
    -1259.1392167224028,
    771.32342877765313,
    -176.61502916214059,
    12.507343278686905,
    -0.13857109526572012,
    9.9843695780195716e-6,
    1.5056327351493116e-7,
)


def _lanczos_rational_coefs():
    """Collapse c0 + sum_i c_i/(z+i) into P(z)/Q(z); computed in float64."""
    n = len(_LANCZOS_COEFS)
    q = np.array([1.0])
    for i in range(1, n):
        q = np.polymul(q, np.array([1.0, float(i)]))
    p = _LANCZOS_COEFS[0] * q
    for i in range(1, n):
        term = np.array([1.0])
        for j in range(1, n):
            if j != i:
                term = np.polymul(term, np.array([1.0, float(j)]))
        p = np.polyadd(p, _LANCZOS_COEFS[i] * term)
    return tuple(float(v) for v in p), tuple(float(v) for v in q)


_P_COEFS, _Q_COEFS = _lanczos_rational_coefs()


def _horner(coefs, z):
    acc = coefs[0] * z + coefs[1]
    for cf in coefs[2:]:
        acc = acc * z + cf
    return acc


# ----------------------------------------------------------------------------
# Pallas kernel: one grid step processes an (8, tl) slab of counts and emits a
# (num_states, 8, tl) slab of negative-binomial log-probabilities.
# ----------------------------------------------------------------------------
def _nb_embed_kernel(rm1_ref, logp_ref, c_ref, k_ref, o_ref):
    rm1 = rm1_ref[0]                     # scalar: eff_coverage - 1 (SMEM)
    k = k_ref[...]                       # (8, tl) float32, full-vreg lane density

    # lgamma(k + r) - lgamma(k + 1) via merged Lanczos:
    #   lgamma(x) = 0.5*log(2*pi) + (z+0.5)*log(t) - t + log(P(z)/Q(z)),
    #   z = x - 1, t = z + g + 0.5.  Constant and (t1 - t2) = r - 1 fold out.
    z1 = k + rm1                         # z for x = k + r
    z2 = k                               # z for x = k + 1
    t1 = z1 + (_LANCZOS_G + 0.5)
    t2 = z2 + (_LANCZOS_G + 0.5)

    p1 = _horner(_P_COEFS, z1)
    q1 = _horner(_Q_COEFS, z1)
    p2 = _horner(_P_COEFS, z2)
    q2 = _horner(_Q_COEFS, z2)
    # (p1/q1)*(q2/p2): both factors are O(1) -> no overflow even for large k.
    ratio = (p1 / q1) * (q2 / p2)

    row = ((z1 + 0.5) * jnp.log(t1)
           - (z2 + 0.5) * jnp.log(t2)
           - rm1
           + jnp.log(ratio))             # (8, tl)

    # Per-state: row + k*log(p_s) + [r*log(1-p_s) - lgamma(r)]  (SMEM scalars).
    num_states = o_ref.shape[0]
    for s in range(num_states):          # static unroll (num_states is small)
        o_ref[s, :, :] = row + k * logp_ref[s] + c_ref[s]


def negative_binomial_embedding(k, logits, eff_coverage, *, block_n=32768):
    """k: (B, S, 1) float counts; logits: (num_states,); eff_coverage: scalar."""
    B, S, one = k.shape
    assert one == 1
    num_states = int(logits.shape[0])
    N = B * S

    # Tile size: multiple of 8*128 = 1024 counts; don't over-pad tiny inputs.
    block_n = ((max(int(block_n), 1024) + 1023) // 1024) * 1024
    block_n = min(block_n, ((N + 1023) // 1024) * 1024)
    n_pad = ((N + block_n - 1) // block_n) * block_n
    L = n_pad // 8
    tl = block_n // 8                    # multiple of 128 -> lane-dense blocks

    # Lane-dense count slab (8, L); pad rows carry k=0 (harmless, sliced off).
    k_flat = jnp.pad(k.reshape(N).astype(jnp.float32), (0, n_pad - N))
    k2 = k_flat.reshape(8, L)

    # Hoist per-call constants out of the grid loop (tiny per-state vectors).
    logits_f = logits.astype(jnp.float32)
    r = jnp.asarray(eff_coverage, jnp.float32)
    log_p = jax.nn.log_sigmoid(logits_f)            # log(sigmoid(x)), stable
    log_1mp = jax.nn.log_sigmoid(-logits_f)         # log(1 - sigmoid(x)), stable
    c = r * log_1mp - jax.lax.lgamma(r)             # per-state constant
    rm1 = jnp.reshape(r - 1.0, (1,))

    out3 = pl.pallas_call(
        _nb_embed_kernel,
        out_shape=jax.ShapeDtypeStruct((num_states, 8, L), jnp.float32),
        grid=(n_pad // block_n,),
        in_specs=[
            pl.BlockSpec(memory_space=pltpu.MemorySpace.SMEM),   # r - 1
            pl.BlockSpec(memory_space=pltpu.MemorySpace.SMEM),   # log_p
            pl.BlockSpec(memory_space=pltpu.MemorySpace.SMEM),   # c
            pl.BlockSpec((8, tl), lambda i: (0, i)),             # counts slab
        ],
        out_specs=pl.BlockSpec((num_states, 8, tl), lambda i: (0, 0, i)),
        compiler_params=pltpu.CompilerParams(
            dimension_semantics=("parallel",)),
    )(rm1, log_p, c, k2)

    # (num_states, 8, L) -> (num_states, n_pad) where column index is the flat
    # row index -> slice padding, transpose back, reshape to (B, S, num_states).
    out2 = out3.reshape(num_states, n_pad)[:, :N]
    return out2.T.reshape(B, S, num_states)


def _reference(k, logits, eff_coverage):
    """Pure-JAX reference mirroring the PyTorch forward."""
    num_states = logits.shape[0]
    kk = jnp.broadcast_to(k, k.shape[:-1] + (num_states,)).astype(jnp.float32)
    r = jnp.asarray(eff_coverage, jnp.float32)
    p = jax.nn.sigmoid(logits.astype(jnp.float32))
    return (
        jax.lax.lgamma(kk + r)
        - jax.lax.lgamma(r)
        - jax.lax.lgamma(kk + 1.0)
        + r * jnp.log(1.0 - p)
        + kk * jnp.log(p)
    )


if __name__ == "__main__":
    # Config-equivalent deterministic parameter init.
    B, S, num_states = 2, 8, 8
    eff_coverage = jnp.float32(10.0)                                  # init_nb_eff_coverage
    logits = jnp.linspace(-1.0, 1.0, num_states, dtype=jnp.float32)   # init_nb_logits

    # Deterministic example input: non-negative counts, shape (B, S, 1).
    key = jax.random.PRNGKey(0)
    k = jax.random.randint(key, (B, S, 1), 0, 20).astype(jnp.float32)

    out = negative_binomial_embedding(k, logits, eff_coverage)
    out = jax.block_until_ready(out)

    ref = _reference(k, logits, eff_coverage)
    np.testing.assert_allclose(np.asarray(out), np.asarray(ref), rtol=1e-4, atol=1e-4)

    print("KERNEL_OK")
</pallas_src>

<mosaic_0001>
module attributes {stable_mosaic.version = 11 : i64} {
  func.func @_nb_embed_kernel(%arg0: i32, %arg1: memref<1xf32, #tpu.memory_space<smem>>, %arg2: memref<8xf32, #tpu.memory_space<smem>>, %arg3: memref<8xf32, #tpu.memory_space<smem>>, %arg4: memref<8x128xf32, #tpu.memory_space<vmem>>, %arg5: memref<8x8x128xf32, #tpu.memory_space<vmem>>) attributes {dimension_semantics = [#tpu.dimension_semantics<parallel>], iteration_bounds = array<i64: 1>, scalar_prefetch = 0 : i64, scratch_operands = 0 : i64, tpu.core_type = #tpu.core_type<tc>, window_params = [{transform_indices = @transform_0, window_bounds = array<i64: 1>}, {transform_indices = @transform_1, window_bounds = array<i64: 8>}, {transform_indices = @transform_2, window_bounds = array<i64: 8>}, {transform_indices = @transform_3, window_bounds = array<i64: 8, 128>}, {transform_indices = @transform_4, window_bounds = array<i64: 8, 8, 128>}]} {
    %c0 = arith.constant 0 : index
    %0 = memref.load %arg1[%c0] : memref<1xf32, #tpu.memory_space<smem>>
    %c0_0 = arith.constant 0 : index
    %c0_1 = arith.constant 0 : index
    %1 = vector.load %arg4[%c0_0, %c0_1] : memref<8x128xf32, #tpu.memory_space<vmem>>, vector<8x128xf32>
    %2 = vector.broadcast %0 : f32 to vector<8x128xf32>
    %3 = arith.addf %1, %2 : vector<8x128xf32>
    %cst = arith.constant 7.500000e+00 : f32
    %4 = vector.broadcast %cst : f32 to vector<8x128xf32>
    %5 = arith.addf %3, %4 : vector<8x128xf32>
    %cst_2 = arith.constant 7.500000e+00 : f32
    %6 = vector.broadcast %cst_2 : f32 to vector<8x128xf32>
    %7 = arith.addf %1, %6 : vector<8x128xf32>
    %cst_3 = arith.constant 1.000000e+00 : f32
    %8 = vector.broadcast %cst_3 : f32 to vector<8x128xf32>
    %9 = arith.mulf %8, %3 : vector<8x128xf32>
    %cst_4 = arith.constant 60.4583321 : f32
    %10 = vector.broadcast %cst_4 : f32 to vector<8x128xf32>
    %11 = arith.addf %9, %10 : vector<8x128xf32>
    %12 = arith.mulf %11, %3 : vector<8x128xf32>
    %cst_5 = arith.constant 1599.04248 : f32
    %13 = vector.broadcast %cst_5 : f32 to vector<8x128xf32>
    %14 = arith.addf %12, %13 : vector<8x128xf32>
    %15 = arith.mulf %14, %3 : vector<8x128xf32>
    %cst_6 = arith.constant 24165.5098 : f32
    %16 = vector.broadcast %cst_6 : f32 to vector<8x128xf32>
    %17 = arith.addf %15, %16 : vector<8x128xf32>
    %18 = arith.mulf %17, %3 : vector<8x128xf32>
    %cst_7 = arith.constant 228235.219 : f32
    %19 = vector.broadcast %cst_7 : f32 to vector<8x128xf32>
    %20 = arith.addf %18, %19 : vector<8x128xf32>
    %21 = arith.mulf %20, %3 : vector<8x128xf32>
    %cst_8 = arith.constant 1379496.25 : f32
    %22 = vector.broadcast %cst_8 : f32 to vector<8x128xf32>
    %23 = arith.addf %21, %22 : vector<8x128xf32>
    %24 = arith.mulf %23, %3 : vector<8x128xf32>
    %cst_9 = arith.constant 0x4A9F05EA : f32
    %25 = vector.broadcast %cst_9 : f32 to vector<8x128xf32>
    %26 = arith.addf %24, %25 : vector<8x128xf32>
    %27 = arith.mulf %26, %3 : vector<8x128xf32>
    %cst_10 = arith.constant 0x4B2B9D51 : f32
    %28 = vector.broadcast %cst_10 : f32 to vector<8x128xf32>
    %29 = arith.addf %27, %28 : vector<8x128xf32>
    %30 = arith.mulf %29, %3 : vector<8x128xf32>
    %cst_11 = arith.constant 0x4B220ADA : f32
    %31 = vector.broadcast %cst_11 : f32 to vector<8x128xf32>
    %32 = arith.addf %30, %31 : vector<8x128xf32>
    %cst_12 = arith.constant 1.000000e+00 : f32
    %33 = vector.broadcast %cst_12 : f32 to vector<8x128xf32>
    %34 = arith.mulf %33, %3 : vector<8x128xf32>
    %cst_13 = arith.constant 3.600000e+01 : f32
    %35 = vector.broadcast %cst_13 : f32 to vector<8x128xf32>
    %36 = arith.addf %34, %35 : vector<8x128xf32>
    %37 = arith.mulf %36, %3 : vector<8x128xf32>
    %cst_14 = arith.constant 5.460000e+02 : f32
    %38 = vector.broadcast %cst_14 : f32 to vector<8x128xf32>
    %39 = arith.addf %37, %38 : vector<8x128xf32>
    %40 = arith.mulf %39, %3 : vector<8x128xf32>
    %cst_15 = arith.constant 4.536000e+03 : f32
    %41 = vector.broadcast %cst_15 : f32 to vector<8x128xf32>
    %42 = arith.addf %40, %41 : vector<8x128xf32>
    %43 = arith.mulf %42, %3 : vector<8x128xf32>
    %cst_16 = arith.constant 2.244900e+04 : f32
    %44 = vector.broadcast %cst_16 : f32 to vector<8x128xf32>
    %45 = arith.addf %43, %44 : vector<8x128xf32>
    %46 = arith.mulf %45, %3 : vector<8x128xf32>
    %cst_17 = arith.constant 6.728400e+04 : f32
    %47 = vector.broadcast %cst_17 : f32 to vector<8x128xf32>
    %48 = arith.addf %46, %47 : vector<8x128xf32>
    %49 = arith.mulf %48, %3 : vector<8x128xf32>
    %cst_18 = arith.constant 1.181240e+05 : f32
    %50 = vector.broadcast %cst_18 : f32 to vector<8x128xf32>
    %51 = arith.addf %49, %50 : vector<8x128xf32>
    %52 = arith.mulf %51, %3 : vector<8x128xf32>
    %cst_19 = arith.constant 1.095840e+05 : f32
    %53 = vector.broadcast %cst_19 : f32 to vector<8x128xf32>
    %54 = arith.addf %52, %53 : vector<8x128xf32>
    %55 = arith.mulf %54, %3 : vector<8x128xf32>
    %cst_20 = arith.constant 4.032000e+04 : f32
    %56 = vector.broadcast %cst_20 : f32 to vector<8x128xf32>
    %57 = arith.addf %55, %56 : vector<8x128xf32>
    %cst_21 = arith.constant 1.000000e+00 : f32
    %58 = vector.broadcast %cst_21 : f32 to vector<8x128xf32>
    %59 = arith.mulf %58, %1 : vector<8x128xf32>
    %cst_22 = arith.constant 60.4583321 : f32
    %60 = vector.broadcast %cst_22 : f32 to vector<8x128xf32>
    %61 = arith.addf %59, %60 : vector<8x128xf32>
    %62 = arith.mulf %61, %1 : vector<8x128xf32>
    %cst_23 = arith.constant 1599.04248 : f32
    %63 = vector.broadcast %cst_23 : f32 to vector<8x128xf32>
    %64 = arith.addf %62, %63 : vector<8x128xf32>
    %65 = arith.mulf %64, %1 : vector<8x128xf32>
    %cst_24 = arith.constant 24165.5098 : f32
    %66 = vector.broadcast %cst_24 : f32 to vector<8x128xf32>
    %67 = arith.addf %65, %66 : vector<8x128xf32>
    %68 = arith.mulf %67, %1 : vector<8x128xf32>
    %cst_25 = arith.constant 228235.219 : f32
    %69 = vector.broadcast %cst_25 : f32 to vector<8x128xf32>
    %70 = arith.addf %68, %69 : vector<8x128xf32>
    %71 = arith.mulf %70, %1 : vector<8x128xf32>
    %cst_26 = arith.constant 1379496.25 : f32
    %72 = vector.broadcast %cst_26 : f32 to vector<8x128xf32>
    %73 = arith.addf %71, %72 : vector<8x128xf32>
    %74 = arith.mulf %73, %1 : vector<8x128xf32>
    %cst_27 = arith.constant 0x4A9F05EA : f32
    %75 = vector.broadcast %cst_27 : f32 to vector<8x128xf32>
    %76 = arith.addf %74, %75 : vector<8x128xf32>
    %77 = arith.mulf %76, %1 : vector<8x128xf32>
    %cst_28 = arith.constant 0x4B2B9D51 : f32
    %78 = vector.broadcast %cst_28 : f32 to vector<8x128xf32>
    %79 = arith.addf %77, %78 : vector<8x128xf32>
    %80 = arith.mulf %79, %1 : vector<8x128xf32>
    %cst_29 = arith.constant 0x4B220ADA : f32
    %81 = vector.broadcast %cst_29 : f32 to vector<8x128xf32>
    %82 = arith.addf %80, %81 : vector<8x128xf32>
    %cst_30 = arith.constant 1.000000e+00 : f32
    %83 = vector.broadcast %cst_30 : f32 to vector<8x128xf32>
    %84 = arith.mulf %83, %1 : vector<8x128xf32>
    %cst_31 = arith.constant 3.600000e+01 : f32
    %85 = vector.broadcast %cst_31 : f32 to vector<8x128xf32>
    %86 = arith.addf %84, %85 : vector<8x128xf32>
    %87 = arith.mulf %86, %1 : vector<8x128xf32>
    %cst_32 = arith.constant 5.460000e+02 : f32
    %88 = vector.broadcast %cst_32 : f32 to vector<8x128xf32>
    %89 = arith.addf %87, %88 : vector<8x128xf32>
    %90 = arith.mulf %89, %1 : vector<8x128xf32>
    %cst_33 = arith.constant 4.536000e+03 : f32
    %91 = vector.broadcast %cst_33 : f32 to vector<8x128xf32>
    %92 = arith.addf %90, %91 : vector<8x128xf32>
    %93 = arith.mulf %92, %1 : vector<8x128xf32>
    %cst_34 = arith.constant 2.244900e+04 : f32
    %94 = vector.broadcast %cst_34 : f32 to vector<8x128xf32>
    %95 = arith.addf %93, %94 : vector<8x128xf32>
    %96 = arith.mulf %95, %1 : vector<8x128xf32>
    %cst_35 = arith.constant 6.728400e+04 : f32
    %97 = vector.broadcast %cst_35 : f32 to vector<8x128xf32>
    %98 = arith.addf %96, %97 : vector<8x128xf32>
    %99 = arith.mulf %98, %1 : vector<8x128xf32>
    %cst_36 = arith.constant 1.181240e+05 : f32
    %100 = vector.broadcast %cst_36 : f32 to vector<8x128xf32>
    %101 = arith.addf %99, %100 : vector<8x128xf32>
    %102 = arith.mulf %101, %1 : vector<8x128xf32>
    %cst_37 = arith.constant 1.095840e+05 : f32
    %103 = vector.broadcast %cst_37 : f32 to vector<8x128xf32>
    %104 = arith.addf %102, %103 : vector<8x128xf32>
    %105 = arith.mulf %104, %1 : vector<8x128xf32>
    %cst_38 = arith.constant 4.032000e+04 : f32
    %106 = vector.broadcast %cst_38 : f32 to vector<8x128xf32>
    %107 = arith.addf %105, %106 : vector<8x128xf32>
    %108 = arith.divf %32, %57 : vector<8x128xf32>
    %109 = arith.divf %107, %82 : vector<8x128xf32>
    %110 = arith.mulf %108, %109 : vector<8x128xf32>
    %cst_39 = arith.constant 5.000000e-01 : f32
    %111 = vector.broadcast %cst_39 : f32 to vector<8x128xf32>
    %112 = arith.addf %3, %111 : vector<8x128xf32>
    %113 = math.log %5 : vector<8x128xf32>
    %114 = arith.mulf %112, %113 : vector<8x128xf32>
    %cst_40 = arith.constant 5.000000e-01 : f32
    %115 = vector.broadcast %cst_40 : f32 to vector<8x128xf32>
    %116 = arith.addf %1, %115 : vector<8x128xf32>
    %117 = math.log %7 : vector<8x128xf32>
    %118 = arith.mulf %116, %117 : vector<8x128xf32>
    %119 = arith.subf %114, %118 : vector<8x128xf32>
    %120 = vector.broadcast %0 : f32 to vector<8x128xf32>
    %121 = arith.subf %119, %120 : vector<8x128xf32>
    %122 = math.log %110 : vector<8x128xf32>
    %123 = arith.addf %121, %122 : vector<8x128xf32>
    %c0_41 = arith.constant 0 : index
    %124 = memref.load %arg2[%c0_41] : memref<8xf32, #tpu.memory_space<smem>>
    %125 = vector.broadcast %124 : f32 to vector<8x128xf32>
    %126 = arith.mulf %1, %125 : vector<8x128xf32>
    %127 = arith.addf %123, %126 : vector<8x128xf32>
    %c0_42 = arith.constant 0 : index
    %128 = memref.load %arg3[%c0_42] : memref<8xf32, #tpu.memory_space<smem>>
    %129 = vector.broadcast %128 : f32 to vector<8x128xf32>
    %130 = arith.addf %127, %129 : vector<8x128xf32>
    %c0_43 = arith.constant 0 : index
    %c0_44 = arith.constant 0 : index
    %c0_45 = arith.constant 0 : index
    %131 = vector.load %arg5[%c0_43, %c0_44, %c0_45] : memref<8x8x128xf32, #tpu.memory_space<vmem>>, vector<1x8x128xf32>
    %132 = vector.shape_cast %131 : vector<1x8x128xf32> to vector<8x128xf32>
    %133 = vector.shape_cast %130 : vector<8x128xf32> to vector<1x8x128xf32>
    tpu.vector_store %arg5[%c0_43, %c0_44, %c0_45], %133 {strides = array<i32>} : memref<8x8x128xf32, #tpu.memory_space<vmem>>, vector<1x8x128xf32>,
    %c1 = arith.constant 1 : index
    %134 = memref.load %arg2[%c1] : memref<8xf32, #tpu.memory_space<smem>>
    %135 = vector.broadcast %134 : f32 to vector<8x128xf32>
    %136 = arith.mulf %1, %135 : vector<8x128xf32>
    %137 = arith.addf %123, %136 : vector<8x128xf32>
    %c1_46 = arith.constant 1 : index
    %138 = memref.load %arg3[%c1_46] : memref<8xf32, #tpu.memory_space<smem>>
    %139 = vector.broadcast %138 : f32 to vector<8x128xf32>
    %140 = arith.addf %137, %139 : vector<8x128xf32>
    %c1_47 = arith.constant 1 : index
    %c0_48 = arith.constant 0 : index
    %c0_49 = arith.constant 0 : index
    %141 = vector.load %arg5[%c1_47, %c0_48, %c0_49] : memref<8x8x128xf32, #tpu.memory_space<vmem>>, vector<1x8x128xf32>
    %142 = vector.shape_cast %141 : vector<1x8x128xf32> to vector<8x128xf32>
    %143 = vector.shape_cast %140 : vector<8x128xf32> to vector<1x8x128xf32>
    tpu.vector_store %arg5[%c1_47, %c0_48, %c0_49], %143 {strides = array<i32>} : memref<8x8x128xf32, #tpu.memory_space<vmem>>, vector<1x8x128xf32>,
    %c2 = arith.constant 2 : index
    %144 = memref.load %arg2[%c2] : memref<8xf32, #tpu.memory_space<smem>>
    %145 = vector.broadcast %144 : f32 to vector<8x128xf32>
    %146 = arith.mulf %1, %145 : vector<8x128xf32>
    %147 = arith.addf %123, %146 : vector<8x128xf32>
    %c2_50 = arith.constant 2 : index
    %148 = memref.load %arg3[%c2_50] : memref<8xf32, #tpu.memory_space<smem>>
    %149 = vector.broadcast %148 : f32 to vector<8x128xf32>
    %150 = arith.addf %147, %149 : vector<8x128xf32>
    %c2_51 = arith.constant 2 : index
    %c0_52 = arith.constant 0 : index
    %c0_53 = arith.constant 0 : index
    %151 = vector.load %arg5[%c2_51, %c0_52, %c0_53] : memref<8x8x128xf32, #tpu.memory_space<vmem>>, vector<1x8x128xf32>
    %152 = vector.shape_cast %151 : vector<1x8x128xf32> to vector<8x128xf32>
    %153 = vector.shape_cast %150 : vector<8x128xf32> to vector<1x8x128xf32>
    tpu.vector_store %arg5[%c2_51, %c0_52, %c0_53], %153 {strides = array<i32>} : memref<8x8x128xf32, #tpu.memory_space<vmem>>, vector<1x8x128xf32>,
    %c3 = arith.constant 3 : index
    %154 = memref.load %arg2[%c3] : memref<8xf32, #tpu.memory_space<smem>>
    %155 = vector.broadcast %154 : f32 to vector<8x128xf32>
    %156 = arith.mulf %1, %155 : vector<8x128xf32>
    %157 = arith.addf %123, %156 : vector<8x128xf32>
    %c3_54 = arith.constant 3 : index
    %158 = memref.load %arg3[%c3_54] : memref<8xf32, #tpu.memory_space<smem>>
    %159 = vector.broadcast %158 : f32 to vector<8x128xf32>
    %160 = arith.addf %157, %159 : vector<8x128xf32>
    %c3_55 = arith.constant 3 : index
    %c0_56 = arith.constant 0 : index
    %c0_57 = arith.constant 0 : index
    %161 = vector.load %arg5[%c3_55, %c0_56, %c0_57] : memref<8x8x128xf32, #tpu.memory_space<vmem>>, vector<1x8x128xf32>
    %162 = vector.shape_cast %161 : vector<1x8x128xf32> to vector<8x128xf32>
    %163 = vector.shape_cast %160 : vector<8x128xf32> to vector<1x8x128xf32>
    tpu.vector_store %arg5[%c3_55, %c0_56, %c0_57], %163 {strides = array<i32>} : memref<8x8x128xf32, #tpu.memory_space<vmem>>, vector<1x8x128xf32>,
    %c4 = arith.constant 4 : index
    %164 = memref.load %arg2[%c4] : memref<8xf32, #tpu.memory_space<smem>>
    %165 = vector.broadcast %164 : f32 to vector<8x128xf32>
    %166 = arith.mulf %1, %165 : vector<8x128xf32>
    %167 = arith.addf %123, %166 : vector<8x128xf32>
    %c4_58 = arith.constant 4 : index
    %168 = memref.load %arg3[%c4_58] : memref<8xf32, #tpu.memory_space<smem>>
    %169 = vector.broadcast %168 : f32 to vector<8x128xf32>
    %170 = arith.addf %167, %169 : vector<8x128xf32>
    %c4_59 = arith.constant 4 : index
    %c0_60 = arith.constant 0 : index
    %c0_61 = arith.constant 0 : index
    %171 = vector.load %arg5[%c4_59, %c0_60, %c0_61] : memref<8x8x128xf32, #tpu.memory_space<vmem>>, vector<1x8x128xf32>
    %172 = vector.shape_cast %171 : vector<1x8x128xf32> to vector<8x128xf32>
    %173 = vector.shape_cast %170 : vector<8x128xf32> to vector<1x8x128xf32>
    tpu.vector_store %arg5[%c4_59, %c0_60, %c0_61], %173 {strides = array<i32>} : memref<8x8x128xf32, #tpu.memory_space<vmem>>, vector<1x8x128xf32>,
    %c5 = arith.constant 5 : index
    %174 = memref.load %arg2[%c5] : memref<8xf32, #tpu.memory_space<smem>>
    %175 = vector.broadcast %174 : f32 to vector<8x128xf32>
    %176 = arith.mulf %1, %175 : vector<8x128xf32>
    %177 = arith.addf %123, %176 : vector<8x128xf32>
    %c5_62 = arith.constant 5 : index
    %178 = memref.load %arg3[%c5_62] : memref<8xf32, #tpu.memory_space<smem>>
    %179 = vector.broadcast %178 : f32 to vector<8x128xf32>
    %180 = arith.addf %177, %179 : vector<8x128xf32>
    %c5_63 = arith.constant 5 : index
    %c0_64 = arith.constant 0 : index
    %c0_65 = arith.constant 0 : index
    %181 = vector.load %arg5[%c5_63, %c0_64, %c0_65] : memref<8x8x128xf32, #tpu.memory_space<vmem>>, vector<1x8x128xf32>
    %182 = vector.shape_cast %181 : vector<1x8x128xf32> to vector<8x128xf32>
    %183 = vector.shape_cast %180 : vector<8x128xf32> to vector<1x8x128xf32>
    tpu.vector_store %arg5[%c5_63, %c0_64, %c0_65], %183 {strides = array<i32>} : memref<8x8x128xf32, #tpu.memory_space<vmem>>, vector<1x8x128xf32>,
    %c6 = arith.constant 6 : index
    %184 = memref.load %arg2[%c6] : memref<8xf32, #tpu.memory_space<smem>>
    %185 = vector.broadcast %184 : f32 to vector<8x128xf32>
    %186 = arith.mulf %1, %185 : vector<8x128xf32>
    %187 = arith.addf %123, %186 : vector<8x128xf32>
    %c6_66 = arith.constant 6 : index
    %188 = memref.load %arg3[%c6_66] : memref<8xf32, #tpu.memory_space<smem>>
    %189 = vector.broadcast %188 : f32 to vector<8x128xf32>
    %190 = arith.addf %187, %189 : vector<8x128xf32>
    %c6_67 = arith.constant 6 : index
    %c0_68 = arith.constant 0 : index
    %c0_69 = arith.constant 0 : index
    %191 = vector.load %arg5[%c6_67, %c0_68, %c0_69] : memref<8x8x128xf32, #tpu.memory_space<vmem>>, vector<1x8x128xf32>
    %192 = vector.shape_cast %191 : vector<1x8x128xf32> to vector<8x128xf32>
    %193 = vector.shape_cast %190 : vector<8x128xf32> to vector<1x8x128xf32>
    tpu.vector_store %arg5[%c6_67, %c0_68, %c0_69], %193 {strides = array<i32>} : memref<8x8x128xf32, #tpu.memory_space<vmem>>, vector<1x8x128xf32>,
    %c7 = arith.constant 7 : index
    %194 = memref.load %arg2[%c7] : memref<8xf32, #tpu.memory_space<smem>>
    %195 = vector.broadcast %194 : f32 to vector<8x128xf32>
    %196 = arith.mulf %1, %195 : vector<8x128xf32>
    %197 = arith.addf %123, %196 : vector<8x128xf32>
    %c7_70 = arith.constant 7 : index
    %198 = memref.load %arg3[%c7_70] : memref<8xf32, #tpu.memory_space<smem>>
    %199 = vector.broadcast %198 : f32 to vector<8x128xf32>
    %200 = arith.addf %197, %199 : vector<8x128xf32>
    %c7_71 = arith.constant 7 : index
    %c0_72 = arith.constant 0 : index
    %c0_73 = arith.constant 0 : index
    %201 = vector.load %arg5[%c7_71, %c0_72, %c0_73] : memref<8x8x128xf32, #tpu.memory_space<vmem>>, vector<1x8x128xf32>
    %202 = vector.shape_cast %201 : vector<1x8x128xf32> to vector<8x128xf32>
    %203 = vector.shape_cast %200 : vector<8x128xf32> to vector<1x8x128xf32>
    tpu.vector_store %arg5[%c7_71, %c0_72, %c0_73], %203 {strides = array<i32>} : memref<8x8x128xf32, #tpu.memory_space<vmem>>, vector<1x8x128xf32>,
    return
  }
  func.func @transform_0(%arg0: i32) -> i32 {
    %c0_i32 = arith.constant 0 : i32
    %c0_i32_0 = arith.constant 0 : i32
    return %c0_i32 : i32
  }
  func.func @transform_1(%arg0: i32) -> i32 {
    %c0_i32 = arith.constant 0 : i32
    %c0_i32_0 = arith.constant 0 : i32
    return %c0_i32 : i32
  }
  func.func @transform_2(%arg0: i32) -> i32 {
    %c0_i32 = arith.constant 0 : i32
    %c0_i32_0 = arith.constant 0 : i32
    return %c0_i32 : i32
  }
  func.func @transform_3(%arg0: i32) -> (i32, i32) {
    %c0_i32 = arith.constant 0 : i32
    %c0_i32_0 = arith.constant 0 : i32
    return %c0_i32, %arg0 : i32, i32
  }
  func.func @transform_4(%arg0: i32) -> (i32, i32, i32) {
    %c0_i32 = arith.constant 0 : i32
    %c0_i32_0 = arith.constant 0 : i32
    %c0_i32_1 = arith.constant 0 : i32
    return %c0_i32, %c0_i32_0, %arg0 : i32, i32, i32
  }
}

</mosaic_0001>

<llo_original>
// kernel: tpu_custom_call.1
$region0: #{tpu_custom_call.1}
  #allocation0 [shape = 'u32[]', space=smem, size = 0x4, offset = 0x4, fixed_abs, tag = 'smem constant byte address 0x4 - core index']
  #allocation1 [shape = 'u32[144,128]{1,0:T(1,128)}', space=vmem, size = 0x12000, scoped, tag = 'internal scratch']
  #allocation2 [shape = 'f32[1]{0:T(128)S(6)}', space=smem, size = 0x200, scoped, tag = 'scoped memory for tpu_custom_call.1']
  %s0 = inlined_call_operand.<no memory space> [shape: f32[1], index: 0, kind: input, shape index: {}]
  %s1 = inlined_call_operand.vmem [shape: f32[8], index: 1, kind: input, shape index: {}]
  %s2 = inlined_call_operand.vmem [shape: f32[8], index: 2, kind: input, shape index: {}]
  %s3 = inlined_call_operand.vmem [shape: f32[8,128], index: 3, kind: input, shape index: {}]
  %s4 = inlined_call_operand.hbm [shape: f32[8,8,128], index: 4, kind: output, shape index: {}]
  %s5 = sld [smem:[#allocation0]]
  $region34: #{tpu_custom_call.1} parent=0
    _
  %s7 = ssub.s32 1, %s5
  %s8 = scalar_select 0, %s7, %s5
  %9 = sst [smem:[#allocation2]] %s0
  $region1: #{tpu_custom_call.1} parent=0
    #allocation3 [shape = 'u8[512]{0}', space=smem, size = 0x200, scoped, tag = 'input window, operand 1, single buffered']
    #allocation4 [shape = 's32[1]{0}', space=sflag, size = 0x4, scoped, tag = 'scoped memory for tpu_custom_call.1']
    #allocation5 [shape = 's32[1]{0}', space=sflag, size = 0x4, scoped, tag = 'scoped memory for tpu_custom_call.1']
    #allocation6 [shape = 'u8[512]{0}', space=smem, size = 0x200, scoped, tag = 'input window, operand 2, single buffered']
    #allocation7 [shape = 's32[1]{0}', space=sflag, size = 0x4, scoped, tag = 'scoped memory for tpu_custom_call.1']
    #allocation8 [shape = 'u8[32768]{0}', space=vmem, size = 0x8000, scoped, tag = 'output window, operand 0, single buffered']
    %10 = vsyncpa [#allocation5], 0
    %11 = vsyncpa [#allocation7], 0
    %12 = vsyncpa [#allocation4], 0
    // Predicated region
    $region2: #{tpu_custom_call.1} parent=1 // pred_check
      _
    $region3: #{tpu_custom_call.1} parent=1 // pred_check_branch
      %14 = sbr.rel (0) target = $region5
    $region4: #{tpu_custom_call.1} parent=1 // pred_region
      _
    $region5: #{tpu_custom_call.1} parent=1 // pred_fallthru
      _
    // Predicated region
    $region6: #{tpu_custom_call.1} parent=1 // pred_check
      _
    $region7: #{tpu_custom_call.1} parent=1 // pred_check_branch
      %16 = sbr.rel (0) target = $region9
    $region8: #{tpu_custom_call.1} parent=1 // pred_region
      %s18 = ssub.s32 16, 16
      %19 = vsyncadd [#allocation5], %s18
      %s21 = sshll.u32 %s1, 4
      %s22 = int_to_ptr.vmem [resolvable:$true] %s21
      %24 = dma.vmem_to_smem %s22, 16, [#allocation3], [#allocation5]
    $region9: #{tpu_custom_call.1} parent=1 // pred_fallthru
      _
    // Predicated region
    $region10: #{tpu_custom_call.1} parent=1 // pred_check
      _
    $region11: #{tpu_custom_call.1} parent=1 // pred_check_branch
      %26 = sbr.rel (0) target = $region13
    $region12: #{tpu_custom_call.1} parent=1 // pred_region
      %s28 = ssub.s32 16, 16
      %29 = vsyncadd [#allocation7], %s28
      %s31 = sshll.u32 %s2, 4
      %s32 = int_to_ptr.vmem [resolvable:$true] %s31
      %34 = dma.vmem_to_smem %s32, 16, [#allocation6], [#allocation7]
    $region13: #{tpu_custom_call.1} parent=1 // pred_fallthru
      _
    // Predicated region
    $region14: #{tpu_custom_call.1} parent=1 // pred_check
      _
    $region15: #{tpu_custom_call.1} parent=1 // pred_check_branch
      %36 = sbr.rel (0) target = $region17
    $region16: #{tpu_custom_call.1} parent=1 // pred_region
      _
    $region17: #{tpu_custom_call.1} parent=1 // pred_fallthru
      _
    // Predicated region
    $region18: #{tpu_custom_call.1} parent=1 // pred_check
      _
    $region19: #{tpu_custom_call.1} parent=1 // pred_check_branch
      %38 = sbr.rel (0) target = $region21
    $region20: #{tpu_custom_call.1} parent=1 // pred_region
      %39 = dma.done [#allocation5], 16
    $region21: #{tpu_custom_call.1} parent=1 // pred_fallthru
      _
    // Predicated region
    $region22: #{tpu_custom_call.1} parent=1 // pred_check
      _
    $region23: #{tpu_custom_call.1} parent=1 // pred_check_branch
      %41 = sbr.rel (0) target = $region25
    $region24: #{tpu_custom_call.1} parent=1 // pred_region
      %42 = dma.done [#allocation7], 16
    $region25: #{tpu_custom_call.1} parent=1 // pred_fallthru
      _
    %43 = sfence
    %s44 = sld [smem:[#allocation2]]
    %v45 = vld [vmem:[%s3] sm:$0xff]
    %v46 = vstv %s44
    %v47 = vadd.f32 %v45, %v46
    %v48 = vadd.f32 %v47, 7.5
    %v49 = vadd.f32 %v45, 7.5
    %v50 = vadd.f32 %v47, 60.458332
    %v51 = vmul.f32 %v50, %v47
    %v52 = vadd.f32 %v51, 1599.0425
    %v53 = vmul.f32 %v52, %v47
    %v54 = vadd.f32 %v53, 24165.51
    %v55 = vmul.f32 %v54, %v47
    %v56 = vadd.f32 %v55, 228235.22
    %v57 = vmul.f32 %v56, %v47
    %v58 = vadd.f32 %v57, 1379496.3
    %v59 = vmul.f32 %v58, %v47
    %v60 = vadd.f32 %v59, 5210869.0
    %v61 = vmul.f32 %v60, %v47
    %v62 = vadd.f32 %v61, 11246929.0
    %v63 = vmul.f32 %v62, %v47
    %v64 = vadd.f32 %v63, 10619610.0
    %v65 = vadd.f32 %v47, 36.0
    %v66 = vmul.f32 %v65, %v47
    %v67 = vadd.f32 %v66, 546.0
    %v68 = vmul.f32 %v67, %v47
    %v69 = vadd.f32 %v68, 4536.0
    %v70 = vmul.f32 %v69, %v47
    %v71 = vadd.f32 %v70, 22449.0
    %v72 = vmul.f32 %v71, %v47
    %v73 = vadd.f32 %v72, 67284.0
    %v74 = vmul.f32 %v73, %v47
    %v75 = vadd.f32 %v74, 118124.0
    %v76 = vmul.f32 %v75, %v47
    %v77 = vadd.f32 %v76, 109584.0
    %v78 = vmul.f32 %v77, %v47
    %v79 = vadd.f32 %v78, 40320.0
    %v80 = vadd.f32 %v45, 60.458332
    %v81 = vmul.f32 %v80, %v45
    %v82 = vadd.f32 %v81, 1599.0425
    %v83 = vmul.f32 %v82, %v45
    %v84 = vadd.f32 %v83, 24165.51
    %v85 = vmul.f32 %v84, %v45
    %v86 = vadd.f32 %v85, 228235.22
    %v87 = vmul.f32 %v86, %v45
    %v88 = vadd.f32 %v87, 1379496.3
    %v89 = vmul.f32 %v88, %v45
    %v90 = vadd.f32 %v89, 5210869.0
    %v91 = vmul.f32 %v90, %v45
    %v92 = vadd.f32 %v91, 11246929.0
    %v93 = vmul.f32 %v92, %v45
    %v94 = vadd.f32 %v93, 10619610.0
    %v95 = vadd.f32 %v45, 36.0
    %v96 = vmul.f32 %v95, %v45
    %v97 = vadd.f32 %v96, 546.0
    %v98 = vmul.f32 %v97, %v45
    %v99 = vadd.f32 %v98, 4536.0
    %v100 = vmul.f32 %v99, %v45
    %v101 = vadd.f32 %v100, 22449.0
    %v102 = vmul.f32 %v101, %v45
    %v103 = vadd.f32 %v102, 67284.0
    %v104 = vmul.f32 %v103, %v45
    %v105 = vadd.f32 %v104, 118124.0
    %v106 = vmul.f32 %v105, %v45
    %v107 = vadd.f32 %v106, 109584.0
    %v108 = vmul.f32 %v107, %v45
    %v109 = vadd.f32 %v108, 40320.0
    %v110 = vrcp.pop %v79
    %v111 = vmul.f32 %v64, %v110
    %v112 = vrcp.pop %v94
    %v113 = vmul.f32 %v109, %v112
    %v114 = vmul.f32 %v111, %v113
    %v115 = vadd.f32 %v47, 0.5
    %v116 = vlog2.pop %v48
    %v117 = vmul.f32 %v116, 0.6931472
    %v118 = vmul.f32 %v115, %v117
    %v119 = vadd.f32 %v45, 0.5
    %v120 = vlog2.pop %v49
    %v121 = vmul.f32 %v120, 0.6931472
    %v122 = vmul.f32 %v119, %v121
    %v123 = vsub.f32 %v118, %v122
    %v124 = vsub.f32 %v123, %v46
    %v125 = vlog2.pop %v114
    %v126 = vmul.f32 %v125, 0.6931472
    %v127 = vadd.f32 %v124, %v126
    %s128 = sld [smem:[#allocation3]]
    %v129 = vstv %s128
    %v130 = vmul.f32 %v45, %v129
    %v131 = vadd.f32 %v127, %v130
    %s132 = sld [smem:[#allocation6]]
    %v133 = vstv %s132
    %v134 = vadd.f32 %v131, %v133
    %135 = vst [vmem:[#allocation8] sm:$0xff] %v134
    %s136 = sld [smem:[#allocation3 + $0x1]]
    %v137 = vstv %s136
    %v138 = vmul.f32 %v45, %v137
    %v139 = vadd.f32 %v127, %v138
    %s140 = sld [smem:[#allocation6 + $0x1]]
    %v141 = vstv %s140
    %v142 = vadd.f32 %v139, %v141
    %s143 = scalar_lea.vmem [#allocation8], 8
    %144 = vst [vmem:[%s143] sm:$0xff] %v142
    %s145 = sld [smem:[#allocation3 + $0x2]]
    %v146 = vstv %s145
    %v147 = vmul.f32 %v45, %v146
    %v148 = vadd.f32 %v127, %v147
    %s149 = sld [smem:[#allocation6 + $0x2]]
    %v150 = vstv %s149
    %v151 = vadd.f32 %v148, %v150
    %s152 = scalar_lea.vmem [#allocation8], 16
    %153 = vst [vmem:[%s152] sm:$0xff] %v151
    %s154 = sld [smem:[#allocation3 + $0x3]]
    %v155 = vstv %s154
    %v156 = vmul.f32 %v45, %v155
    %v157 = vadd.f32 %v127, %v156
    %s158 = sld [smem:[#allocation6 + $0x3]]
    %v159 = vstv %s158
    %v160 = vadd.f32 %v157, %v159
    %s161 = scalar_lea.vmem [#allocation8], 24
    %162 = vst [vmem:[%s161] sm:$0xff] %v160
    %s163 = sld [smem:[#allocation3 + $0x4]]
    %v164 = vstv %s163
    %v165 = vmul.f32 %v45, %v164
    %v166 = vadd.f32 %v127, %v165
    %s167 = sld [smem:[#allocation6 + $0x4]]
    %v168 = vstv %s167
    %v169 = vadd.f32 %v166, %v168
    %s170 = scalar_lea.vmem [#allocation8], 32
    %171 = vst [vmem:[%s170] sm:$0xff] %v169
    %s172 = sld [smem:[#allocation3 + $0x5]]
    %v173 = vstv %s172
    %v174 = vmul.f32 %v45, %v173
    %v175 = vadd.f32 %v127, %v174
    %s176 = sld [smem:[#allocation6 + $0x5]]
    %v177 = vstv %s176
    %v178 = vadd.f32 %v175, %v177
    %s179 = scalar_lea.vmem [#allocation8], 40
    %180 = vst [vmem:[%s179] sm:$0xff] %v178
    %s181 = sld [smem:[#allocation3 + $0x6]]
    %v182 = vstv %s181
    %v183 = vmul.f32 %v45, %v182
    %v184 = vadd.f32 %v127, %v183
    %s185 = sld [smem:[#allocation6 + $0x6]]
    %v186 = vstv %s185
    %v187 = vadd.f32 %v184, %v186
    %s188 = scalar_lea.vmem [#allocation8], 48
    %189 = vst [vmem:[%s188] sm:$0xff] %v187
    %s190 = sld [smem:[#allocation3 + $0x7]]
    %v191 = vstv %s190
    %v192 = vmul.f32 %v45, %v191
    %v193 = vadd.f32 %v127, %v192
    %s194 = sld [smem:[#allocation6 + $0x7]]
    %v195 = vstv %s194
    %v196 = vadd.f32 %v193, %v195
    %s197 = scalar_lea.vmem [#allocation8], 56
    %198 = vst [vmem:[%s197] sm:$0xff] %v196
    // Predicated region
    $region26: #{tpu_custom_call.1} parent=1 // pred_check
      _
    $region27: #{tpu_custom_call.1} parent=1 // pred_check_branch
      %200 = sbr.rel (0) target = $region29
    $region28: #{tpu_custom_call.1} parent=1 // pred_region
      %s202 = ssub.s32 1024, 1024
      %203 = vsyncadd [#allocation4], %s202
      %s204 = sshll.u32 [#allocation8], 4
      %s205 = int_to_ptr.vmem [resolvable:$true] %s204
      %210 = dma.vmem_to_hbm [thread:$0]  %s205, 1024, %s4, [#allocation4], 128, 128, 8
    $region29: #{tpu_custom_call.1} parent=1 // pred_fallthru
      _
    // Predicated region
    $region30: #{tpu_custom_call.1} parent=1 // pred_check
      _
    $region31: #{tpu_custom_call.1} parent=1 // pred_check_branch
      %212 = sbr.rel (0) target = $region33
    $region32: #{tpu_custom_call.1} parent=1 // pred_region
      %213 = dma.done [#allocation4], 1024
    $region33: #{tpu_custom_call.1} parent=1 // pred_fallthru
      _
    %214 = vsyncpa [#allocation4], 1
    %215 = vsyncpa [#allocation5], 1
    %216 = vsyncpa [#allocation7], 1

</llo_original>
